<compile_context>
chip_gen: v5e
topology: v5e:2x2
jax: 0.10.0
libtpu: 0.0.40
codegen_flags: <defaults>
</compile_context>

<pallas_src>
import math

import jax
import jax.numpy as jnp
from jax.experimental import pallas as pl
from jax.experimental.pallas import tpu as pltpu


def _copy_kernel(x_ref, o_ref):
    # Pure pass-through: the BlockSpec pipeline performs all data movement.
    o_ref[...] = x_ref[...]


def _sublane_multiple(dtype) -> int:
    # f32 -> 8, bf16/f16 -> 16, int8/fp8 -> 32 (sub-32-bit packs along sublanes).
    itemsize = jnp.dtype(dtype).itemsize
    return max(8, 32 // max(itemsize, 1))


def _pallas_copy_flat(x_flat, *, block_bytes, vmem_limit_bytes=None):
    """Tiled HBM->VMEM->HBM identity copy of a flat (1-D) array."""
    total = int(x_flat.size)
    dtype = x_flat.dtype
    itemsize = jnp.dtype(dtype).itemsize

    if total % 128 == 0:
        # Lane-dense slab: cols is a multiple of 128 that divides total (<= 4096).
        cols = 128 * math.gcd(total // 128, 32)
        rows = total // cols
    else:
        # TODO(synk): non-128-aligned totals would need a 128-aligned main chunk
        # plus a remainder tile; only the small single-block case is handled.
        if total * itemsize * 4 > (8 << 20):
            raise ValueError(
                "non-128-aligned flat size too large for a single-block copy")
        cols = total
        rows = 1

    sub = _sublane_multiple(dtype)
    if rows <= sub:
        tm = rows                                   # block == full dim: legal
    else:
        budget_rows = max(sub, block_bytes // (cols * itemsize))
        tm = min(rows, (budget_rows // sub) * sub)  # multiple of sublane packing

    x2 = x_flat.reshape(rows, cols)                 # metadata only (contiguous)
    grid = (pl.cdiv(rows, tm),)

    params = dict(dimension_semantics=("parallel",))
    if vmem_limit_bytes is not None:
        params["vmem_limit_bytes"] = vmem_limit_bytes

    out = pl.pallas_call(
        _copy_kernel,
        out_shape=jax.ShapeDtypeStruct((rows, cols), dtype),
        grid=grid,
        in_specs=[pl.BlockSpec((tm, cols), lambda i: (i, 0))],
        out_specs=pl.BlockSpec((tm, cols), lambda i: (i, 0)),
        input_output_aliases={0: 0},
        compiler_params=pltpu.CompilerParams(**params),
        cost_estimate=pl.CostEstimate(
            flops=0, transcendentals=0, bytes_accessed=2 * total * itemsize),
    )(x2)
    return out.reshape(total)


def reshape_forward(x, outer_shape, *, materialize=False,
                    block_bytes=2 << 20, vmem_limit_bytes=None):
    """Pallas equivalent of Reshape(outer_shape): x.view(x.shape[0], *outer_shape).

    Default path is metadata-only (zero HBM traffic).  Set materialize=True to
    force a tiled Pallas copy into a fresh buffer.
    """
    B = x.shape[0]
    F = math.prod(x.shape[1:]) if x.ndim > 1 else 1
    F_out = math.prod(outer_shape) if len(outer_shape) > 0 else 1
    if F != F_out:
        raise ValueError(
            f"cannot reshape {x.shape} to (batch, *{tuple(outer_shape)})")
    out_shape = (B,) + tuple(outer_shape)

    if not materialize:
        # Contiguous row-major reshape keeping the batch dim: metadata only.
        return jnp.reshape(x, out_shape)

    flat = _pallas_copy_flat(x.reshape(-1), block_bytes=block_bytes,
                             vmem_limit_bytes=vmem_limit_bytes)
    return flat.reshape(out_shape)


if __name__ == "__main__":
    key = jax.random.PRNGKey(0)
    k1, k2 = jax.random.split(key)

    # Case 1: module-style usage (batch, C, H, W) -> (batch, 16, 64).
    x = jax.random.normal(k1, (2, 4, 16, 16), jnp.float32)
    outer_shape = (16, 64)
    ref = jnp.reshape(x, (x.shape[0],) + outer_shape)

    # Default (metadata-only) path.
    y_meta = reshape_forward(x, outer_shape)
    jax.block_until_ready(y_meta)
    assert y_meta.shape == (2, 16, 64)
    assert jnp.array_equal(y_meta, ref)

    # Materialized Pallas copy path.
    y_kern = reshape_forward(x, outer_shape, materialize=True)
    jax.block_until_ready(y_kern)
    assert y_kern.shape == (2, 16, 64)
    assert jnp.array_equal(y_kern, ref)

    # Case 2: larger input with a small block budget to exercise the
    # multi-block parallel grid (rows=32, cols=4096, tm=8 -> 4 blocks).
    x2 = jax.random.normal(k2, (64, 8, 16, 16), jnp.float32)
    ref2 = jnp.reshape(x2, (64, 32, 64))
    y2 = reshape_forward(x2, (32, 64), materialize=True, block_bytes=128 << 10)
    jax.block_until_ready(y2)
    assert y2.shape == (64, 32, 64)
    assert jnp.array_equal(y2, ref2)

    print("KERNEL_OK")
</pallas_src>

<mosaic_0001>
module attributes {stable_mosaic.version = 11 : i64} {
  func.func @_copy_kernel(%arg0: i32, %arg1: memref<1x2048xf32, #tpu.memory_space<vmem>>, %arg2: memref<1x2048xf32, #tpu.memory_space<vmem>>) attributes {dimension_semantics = [#tpu.dimension_semantics<parallel>], iteration_bounds = array<i64: 1>, scalar_prefetch = 0 : i64, scratch_operands = 0 : i64, tpu.core_type = #tpu.core_type<tc>, window_params = [{transform_indices = @transform_0, window_bounds = array<i64: 1, 2048>}, {transform_indices = @transform_1, window_bounds = array<i64: 1, 2048>}]} {
    %c0 = arith.constant 0 : index
    %c0_0 = arith.constant 0 : index
    %0 = vector.load %arg1[%c0, %c0_0] : memref<1x2048xf32, #tpu.memory_space<vmem>>, vector<1x2048xf32>
    %c0_1 = arith.constant 0 : index
    %c0_2 = arith.constant 0 : index
    %1 = vector.load %arg2[%c0_1, %c0_2] : memref<1x2048xf32, #tpu.memory_space<vmem>>, vector<1x2048xf32>
    tpu.vector_store %arg2[%c0_1, %c0_2], %0 {strides = array<i32>} : memref<1x2048xf32, #tpu.memory_space<vmem>>, vector<1x2048xf32>,
    return
  }
  func.func @transform_0(%arg0: i32) -> (i32, i32) {
    %c0_i32 = arith.constant 0 : i32
    %c0_i32_0 = arith.constant 0 : i32
    return %arg0, %c0_i32 : i32, i32
  }
  func.func @transform_1(%arg0: i32) -> (i32, i32) {
    %c0_i32 = arith.constant 0 : i32
    %c0_i32_0 = arith.constant 0 : i32
    return %arg0, %c0_i32 : i32, i32
  }
}

</mosaic_0001>

<llo_original>
// kernel: tpu_custom_call.1
$region0: #{tpu_custom_call.1}
  #allocation0 [shape = 'u32[]', space=smem, size = 0x4, offset = 0x4, fixed_abs, tag = 'smem constant byte address 0x4 - core index']
  #allocation1 [shape = 'u32[72,128]{1,0:T(1,128)}', space=vmem, size = 0x9000, scoped, tag = 'internal scratch']
  %s0 = inlined_call_operand.hbm [shape: f32[1,2048], index: 0, kind: input, shape index: {}, may-alias: {0,1}]
  %s1 = inlined_call_operand.hbm [shape: f32[1,2048], index: 1, kind: output, shape index: {}, may-alias: {0,1}]
  %s2 = sld [smem:[#allocation0]]
  $region18: #{tpu_custom_call.1} parent=0
    _
  %s4 = ssub.s32 1, %s2
  %s5 = scalar_select 0, %s4, %s2
  $region1: #{tpu_custom_call.1} parent=0
    #allocation2 [shape = 'u8[8192]{0}', space=vmem, size = 0x2000, scoped, tag = 'input window, operand 0, single buffered']
    #allocation3 [shape = 's32[1]{0}', space=sflag, size = 0x4, scoped, tag = 'scoped memory for tpu_custom_call.1']
    #allocation4 [shape = 's32[1]{0}', space=sflag, size = 0x4, scoped, tag = 'scoped memory for tpu_custom_call.1']
    #allocation5 [shape = 'u8[8192]{0}', space=vmem, size = 0x2000, scoped, tag = 'output window, operand 0, single buffered']
    %6 = vsyncpa [#allocation3], 0
    %7 = vsyncpa [#allocation4], 0
    // Predicated region
    $region2: #{tpu_custom_call.1} parent=1 // pred_check
      _
    $region3: #{tpu_custom_call.1} parent=1 // pred_check_branch
      %9 = sbr.rel (0) target = $region5
    $region4: #{tpu_custom_call.1} parent=1 // pred_region
      %11 = vsyncadd [#allocation3], 0
      %s13 = sshll.u32 %s0, 4
      %s14 = int_to_ptr.hbm [resolvable:$true] %s13
      %s15 = sshll.u32 [#allocation2], 4
      %s16 = int_to_ptr.vmem [resolvable:$true] %s15
      %18 = dma.hbm_to_vmem [thread:$0]  %s14, 256, %s16, [#allocation3]
    $region5: #{tpu_custom_call.1} parent=1 // pred_fallthru
      _
    // Predicated region
    $region6: #{tpu_custom_call.1} parent=1 // pred_check
      _
    $region7: #{tpu_custom_call.1} parent=1 // pred_check_branch
      %20 = sbr.rel (0) target = $region9
    $region8: #{tpu_custom_call.1} parent=1 // pred_region
      %22 = dma.done [#allocation3], 256
    $region9: #{tpu_custom_call.1} parent=1 // pred_fallthru
      _
    %v23 = vld [vmem:[#allocation2] sm:$0xff]
    %v24 = vld [vmem:[#allocation2 + $0x8] sm:$0xff]
    %25 = vst [vmem:[#allocation5] sm:$0xff] %v23
    %26 = vst [vmem:[#allocation5 + $0x8] sm:$0xff] %v24
    // Predicated region
    $region10: #{tpu_custom_call.1} parent=1 // pred_check
      _
    $region11: #{tpu_custom_call.1} parent=1 // pred_check_branch
      %28 = sbr.rel (0) target = $region13
    $region12: #{tpu_custom_call.1} parent=1 // pred_region
      %30 = vsyncadd [#allocation4], 0
      %s32 = sshll.u32 [#allocation5], 4
      %s33 = int_to_ptr.vmem [resolvable:$true] %s32
      %s34 = sshll.u32 %s1, 4
      %s35 = int_to_ptr.hbm [resolvable:$true] %s34
      %37 = dma.vmem_to_hbm [thread:$0]  %s33, 256, %s35, [#allocation4]
    $region13: #{tpu_custom_call.1} parent=1 // pred_fallthru
      _
    // Predicated region
    $region14: #{tpu_custom_call.1} parent=1 // pred_check
      _
    $region15: #{tpu_custom_call.1} parent=1 // pred_check_branch
      %39 = sbr.rel (0) target = $region17
    $region16: #{tpu_custom_call.1} parent=1 // pred_region
      %41 = dma.done [#allocation4], 256
    $region17: #{tpu_custom_call.1} parent=1 // pred_fallthru
      _
    %42 = vsyncpa [#allocation3], 1
    %43 = vsyncpa [#allocation4], 1

</llo_original>
